<compile_context>
chip_gen: v5e
topology: v5e:2x2
jax: 0.10.0
libtpu: 0.0.40
codegen_flags: <defaults>
</compile_context>

<pallas_src>
import functools

import jax
import jax.numpy as jnp
from jax.experimental import pallas as pl
from jax.experimental.pallas import tpu as pltpu


def _round_up(x, m):
    return ((x + m - 1) // m) * m


def _pool_cos_kernel(audio_ref, label_ref, w_ref, b_ref, out_ref,
                     m_a, l_a, acc_a, m_b, l_b, acc_b,
                     *, seq_tile, num_seq_tiles, valid_tail):
    """One (batch row, seq chunk) step of fused attention pooling + cosine.

    audio_ref, label_ref : (seq_tile, H)  encoder hidden-state chunks (bf16/f32)
    w_ref                : (1, H)         attention Linear weight (same dtype as x)
    b_ref                : (1,)   f32     attention Linear bias (SMEM)
    out_ref              : (1, 1) f32     cosine similarity for this batch row
    m_*, l_*, acc_*      : f32 VMEM scratch (running max / denom / pooled acc)
    """
    s = pl.program_id(1)

    @pl.when(s == 0)
    def _init():
        neg = jnp.full((1, 1), -1e30, dtype=jnp.float32)
        m_a[...] = neg
        m_b[...] = neg
        l_a[...] = jnp.zeros_like(l_a)
        l_b[...] = jnp.zeros_like(l_b)
        acc_a[...] = jnp.zeros_like(acc_a)
        acc_b[...] = jnp.zeros_like(acc_b)

    # Shared attention-head parameters (hoisted once; used by both streams).
    w = w_ref[...]                # (1, H), hidden dtype -> MXU consumes directly
    bias = b_ref[0]               # f32 scalar from SMEM

    def accumulate(x, score_valid, m_sc, l_sc, acc_sc):
        # MXU: scores = w @ x^T -> (1, seq_tile), lane-dense.  Contracting the
        # last dim of both operands is the standard flash-attn q@k^T pattern;
        # Mosaic lowers it without materializing a (ts, H) transpose.
        scores = jax.lax.dot_general(
            w, x, (((1,), (1,)), ((), ())),
            preferred_element_type=jnp.float32) + bias
        if score_valid is not None:
            scores = jnp.where(score_valid, scores, -1e30)

        # Online softmax update (all f32, v5e-safe on the VPU).
        m_prev = m_sc[...]
        m_new = jnp.maximum(m_prev, jnp.max(scores, axis=-1, keepdims=True))
        alpha = jnp.exp(m_prev - m_new)                       # (1, 1)
        p = jnp.exp(scores - m_new)                           # (1, seq_tile)
        l_sc[...] = alpha * l_sc[...] + jnp.sum(p, axis=-1, keepdims=True)
        # MXU: un-normalized weighted sum  (1, ts) @ (ts, H) -> (1, H) f32 acc.
        acc_sc[...] = alpha * acc_sc[...] + jax.lax.dot_general(
            p.astype(x.dtype), x, (((1,), (0,)), ((), ())),
            preferred_element_type=jnp.float32)
        m_sc[...] = m_new

    def run(mask_tail):
        xa = audio_ref[...]       # bf16/f32 tile, fed to the MXU as-is
        xl = label_ref[...]
        if mask_tail:
            # Tail of a partial last block: the out-of-bounds region of the
            # VMEM buffer is undefined -> zero those rows (select, no math on
            # garbage) and force their scores to -1e30.  Computed once, shared
            # by both streams, and only emitted on the last-block path.
            col = jax.lax.broadcasted_iota(jnp.int32, (1, seq_tile), 1)
            score_valid = col < valid_tail
            row_valid = jax.lax.broadcasted_iota(
                jnp.int32, (seq_tile, 1), 0) < valid_tail
            zero = jnp.zeros((), dtype=xa.dtype)
            xa = jnp.where(row_valid, xa, zero)
            xl = jnp.where(row_valid, xl, zero)
        else:
            score_valid = None
        accumulate(xa, score_valid, m_a, l_a, acc_a)
        accumulate(xl, score_valid, m_b, l_b, acc_b)

    if valid_tail is None:
        run(False)                                  # every block is full
    else:
        @pl.when(s < num_seq_tiles - 1)
        def _full_blocks():
            run(False)

        @pl.when(s == num_seq_tiles - 1)
        def _partial_block():
            run(True)

    @pl.when(s == num_seq_tiles - 1)
    def _finalize():
        pa = acc_a[...] / l_a[...]                  # pooled audio embedding (1, H)
        pb = acc_b[...] / l_b[...]                  # pooled label embedding (1, H)
        dot = jnp.sum(pa * pb, axis=-1, keepdims=True)
        na = jnp.sqrt(jnp.sum(pa * pa, axis=-1, keepdims=True))
        nb = jnp.sqrt(jnp.sum(pb * pb, axis=-1, keepdims=True))
        cos = dot / jnp.maximum(na * nb, 1e-6)      # nn.CosineSimilarity(eps=1e-6)
        out_ref[...] = cos.astype(jnp.float32)


def custom_model_forward(audio_hidden, label_hidden, att_w, att_b,
                         *, seq_tile=None, vmem_budget_bytes=48 << 20):
    """Pallas-backed equivalent of CustomModel.forward (post-encoder).

    audio_hidden, label_hidden : (B, S, H) encoder hidden states (bf16 or f32)
    att_w : (1, H)  attention Linear weight;  att_b : (1, 1) bias
    returns (B,) f32 cosine similarities.
    """
    assert audio_hidden.shape == label_hidden.shape
    B, S, H = audio_hidden.shape
    itemsize = jnp.dtype(audio_hidden.dtype).itemsize

    if seq_tile is None:
        # Full sequence in a single grid step when the double-buffered pair of
        # tiles (2 inputs x 2 pipeline buffers) fits the VMEM budget; else the
        # largest multiple-of-8 tile that does.
        per_row = 4 * H * itemsize
        max_rows = max(int(vmem_budget_bytes // per_row), 8)
        ts = S if S <= max_rows else max((max_rows // 8) * 8, 8)
    else:
        ts = _round_up(max(int(seq_tile), 8), 8)
        if ts >= S:
            ts = S                     # full-dim block, no tail masking needed

    n_tiles = -(-S // ts)
    rem = S - (n_tiles - 1) * ts
    valid_tail = None if rem == ts else rem      # only the last block is partial

    # Shared attention head: weight streamed at the hidden-state dtype so both
    # MXU contractions consume the tiles directly; bias stays f32 in SMEM.
    att_w = att_w.reshape(1, H).astype(audio_hidden.dtype)
    att_b = att_b.reshape(1).astype(jnp.float32)

    kernel = functools.partial(
        _pool_cos_kernel, seq_tile=ts, num_seq_tiles=n_tiles,
        valid_tail=valid_tail)

    # Explicit scoped-VMEM limit: double-buffered input pair + slack, clamped
    # to v7x's 64 MiB physical VMEM (v5e default scoped limit is only 16 MiB).
    vmem_limit = int(min(max(4 * ts * H * itemsize + (8 << 20), 32 << 20),
                         64 << 20))

    out = pl.pallas_call(
        kernel,
        out_shape=jax.ShapeDtypeStruct((B, 1, 1), jnp.float32),
        grid_spec=pltpu.PrefetchScalarGridSpec(
            num_scalar_prefetch=0,
            grid=(B, n_tiles),
            in_specs=[
                pl.BlockSpec((None, ts, H), lambda b, s: (b, s, 0)),   # audio
                pl.BlockSpec((None, ts, H), lambda b, s: (b, s, 0)),   # label
                pl.BlockSpec((1, H), lambda b, s: (0, 0)),             # weight
                pl.BlockSpec(memory_space=pltpu.MemorySpace.SMEM),     # bias
            ],
            out_specs=pl.BlockSpec((None, 1, 1), lambda b, s: (b, 0, 0)),
            scratch_shapes=[
                pltpu.VMEM((1, 1), jnp.float32),   # m  (audio)
                pltpu.VMEM((1, 1), jnp.float32),   # l  (audio)
                pltpu.VMEM((1, H), jnp.float32),   # acc(audio)
                pltpu.VMEM((1, 1), jnp.float32),   # m  (label)
                pltpu.VMEM((1, 1), jnp.float32),   # l  (label)
                pltpu.VMEM((1, H), jnp.float32),   # acc(label)
            ],
        ),
        compiler_params=pltpu.CompilerParams(
            dimension_semantics=("parallel", "arbitrary"),
            vmem_limit_bytes=vmem_limit),
    )(audio_hidden, label_hidden, att_w, att_b)
    return out[:, 0, 0]   # (B,) float32, like cos(...).to(torch.float32)


def _reference_forward(audio_hidden, label_hidden, att_w, att_b):
    """Pure-JAX reference for correctness checking."""
    a = audio_hidden.astype(jnp.float32)
    l = label_hidden.astype(jnp.float32)
    w = att_w.reshape(-1).astype(jnp.float32)
    b = att_b.reshape(()).astype(jnp.float32)

    def pool(x):
        scores = jnp.einsum("bsh,h->bs", x, w) + b
        weights = jax.nn.softmax(scores, axis=-1)
        return jnp.einsum("bs,bsh->bh", weights, x)

    pa = pool(a)
    pb = pool(l)
    dot = jnp.sum(pa * pb, axis=-1)
    na = jnp.linalg.norm(pa, axis=-1)
    nb = jnp.linalg.norm(pb, axis=-1)
    return dot / jnp.maximum(na * nb, 1e-6)


if __name__ == "__main__":
    # Small, deterministic synthetic stand-ins for Whisper encoder outputs
    # (real shapes: S=1500, H=1024 for whisper-medium).
    key = jax.random.PRNGKey(0)
    k1, k2, k3, k4, k5, k6 = jax.random.split(key, 6)

    B, H = 2, 128

    # AttentionPooling parameters: Linear(H, 1) -> weight (1, H), bias (1, 1)
    att_w = (jax.random.normal(k3, (1, H), dtype=jnp.float32)
             / jnp.sqrt(jnp.float32(H)))
    att_b = jax.random.normal(k4, (1, 1), dtype=jnp.float32) * 0.01

    # Test 1: default path -> full sequence in one tile, grid=(B, 1), no mask.
    S1 = 16
    a1 = jax.random.normal(k1, (B, S1, H), dtype=jnp.float32).astype(jnp.bfloat16)
    l1 = jax.random.normal(k2, (B, S1, H), dtype=jnp.float32).astype(jnp.bfloat16)
    out1 = jax.block_until_ready(custom_model_forward(a1, l1, att_w, att_b))
    ref1 = _reference_forward(a1, l1, att_w, att_b)
    assert out1.shape == (B,) and out1.dtype == jnp.float32
    assert jnp.allclose(out1, ref1, atol=1e-2, rtol=1e-2), (out1, ref1)

    # Test 2: multi-tile streaming with a partial (non-dividing) last block ->
    # exercises online-softmax accumulation and in-kernel tail masking.
    S2 = 40
    a2 = jax.random.normal(k5, (B, S2, H), dtype=jnp.float32).astype(jnp.bfloat16)
    l2 = jax.random.normal(k6, (B, S2, H), dtype=jnp.float32).astype(jnp.bfloat16)
    out2 = jax.block_until_ready(
        custom_model_forward(a2, l2, att_w, att_b, seq_tile=16))
    ref2 = _reference_forward(a2, l2, att_w, att_b)
    assert out2.shape == (B,) and out2.dtype == jnp.float32
    assert jnp.allclose(out2, ref2, atol=1e-2, rtol=1e-2), (out2, ref2)

    # Test 3: full-dim single tile whose row count is not a multiple of 8
    # (block_shape equals the full array dims, like the real S=1500 case).
    S3 = 20
    a3 = jax.random.normal(k2, (B, S3, H), dtype=jnp.float32).astype(jnp.bfloat16)
    l3 = jax.random.normal(k1, (B, S3, H), dtype=jnp.float32).astype(jnp.bfloat16)
    out3 = jax.block_until_ready(custom_model_forward(a3, l3, att_w, att_b))
    ref3 = _reference_forward(a3, l3, att_w, att_b)
    assert out3.shape == (B,) and out3.dtype == jnp.float32
    assert jnp.allclose(out3, ref3, atol=1e-2, rtol=1e-2), (out3, ref3)

    print("KERNEL_OK")
</pallas_src>

<mosaic_0001>
module attributes {stable_mosaic.version = 11 : i64} {
  func.func @_pool_cos_kernel(%arg0: i32, %arg1: i32, %arg2: memref<1x16x128xbf16, #tpu.memory_space<vmem>>, %arg3: memref<1x16x128xbf16, #tpu.memory_space<vmem>>, %arg4: memref<1x128xbf16, #tpu.memory_space<vmem>>, %arg5: memref<1xf32, #tpu.memory_space<smem>>, %arg6: memref<1x1x1xf32, #tpu.memory_space<vmem>>, %arg7: memref<1x1xf32, #tpu.memory_space<vmem>>, %arg8: memref<1x1xf32, #tpu.memory_space<vmem>>, %arg9: memref<1x128xf32, #tpu.memory_space<vmem>>, %arg10: memref<1x1xf32, #tpu.memory_space<vmem>>, %arg11: memref<1x1xf32, #tpu.memory_space<vmem>>, %arg12: memref<1x128xf32, #tpu.memory_space<vmem>>) attributes {dimension_semantics = [#tpu.dimension_semantics<parallel>, #tpu.dimension_semantics<arbitrary>], iteration_bounds = array<i64: 2, 1>, scalar_prefetch = 0 : i64, scratch_operands = 6 : i64, tpu.core_type = #tpu.core_type<tc>, window_params = [{transform_indices = @transform_0, window_bounds = array<i64: 1, 16, 128>}, {transform_indices = @transform_1, window_bounds = array<i64: 1, 16, 128>}, {pipeline_mode = #tpu.pipeline_mode<synchronous>, transform_indices = @transform_2, window_bounds = array<i64: 1, 128>}, {transform_indices = @transform_3, window_bounds = array<i64: 1>}, {transform_indices = @transform_4, window_bounds = array<i64: 1, 1, 1>}]} {
    %c0_i32 = arith.constant 0 : i32
    %0 = arith.cmpi eq, %arg1, %c0_i32 : i32
    %1 = arith.extui %0 : i1 to i32
    %c0_i32_0 = arith.constant 0 : i32
    %2 = arith.cmpi ne, %1, %c0_i32_0 : i32
    scf.if %2 {
      %cst_42 = arith.constant -1.000000e+30 : f32
      %64 = vector.broadcast %cst_42 : f32 to vector<1x1xf32>
      %c0_43 = arith.constant 0 : index
      %c0_44 = arith.constant 0 : index
      %65 = vector.load %arg7[%c0_43, %c0_44] : memref<1x1xf32, #tpu.memory_space<vmem>>, vector<1x1xf32>
      tpu.vector_store %arg7[%c0_43, %c0_44], %64 {strides = array<i32>} : memref<1x1xf32, #tpu.memory_space<vmem>>, vector<1x1xf32>,
      %c0_45 = arith.constant 0 : index
      %c0_46 = arith.constant 0 : index
      %66 = vector.load %arg10[%c0_45, %c0_46] : memref<1x1xf32, #tpu.memory_space<vmem>>, vector<1x1xf32>
      tpu.vector_store %arg10[%c0_45, %c0_46], %64 {strides = array<i32>} : memref<1x1xf32, #tpu.memory_space<vmem>>, vector<1x1xf32>,
      %cst_47 = arith.constant 0.000000e+00 : f32
      %67 = vector.broadcast %cst_47 : f32 to vector<1x1xf32>
      %c0_48 = arith.constant 0 : index
      %c0_49 = arith.constant 0 : index
      %68 = vector.load %arg8[%c0_48, %c0_49] : memref<1x1xf32, #tpu.memory_space<vmem>>, vector<1x1xf32>
      tpu.vector_store %arg8[%c0_48, %c0_49], %67 {strides = array<i32>} : memref<1x1xf32, #tpu.memory_space<vmem>>, vector<1x1xf32>,
      %cst_50 = arith.constant 0.000000e+00 : f32
      %69 = vector.broadcast %cst_50 : f32 to vector<1x1xf32>
      %c0_51 = arith.constant 0 : index
      %c0_52 = arith.constant 0 : index
      %70 = vector.load %arg11[%c0_51, %c0_52] : memref<1x1xf32, #tpu.memory_space<vmem>>, vector<1x1xf32>
      tpu.vector_store %arg11[%c0_51, %c0_52], %69 {strides = array<i32>} : memref<1x1xf32, #tpu.memory_space<vmem>>, vector<1x1xf32>,
      %cst_53 = arith.constant 0.000000e+00 : f32
      %71 = vector.broadcast %cst_53 : f32 to vector<1x128xf32>
      %c0_54 = arith.constant 0 : index
      %c0_55 = arith.constant 0 : index
      %72 = vector.load %arg9[%c0_54, %c0_55] : memref<1x128xf32, #tpu.memory_space<vmem>>, vector<1x128xf32>
      tpu.vector_store %arg9[%c0_54, %c0_55], %71 {strides = array<i32>} : memref<1x128xf32, #tpu.memory_space<vmem>>, vector<1x128xf32>,
      %cst_56 = arith.constant 0.000000e+00 : f32
      %73 = vector.broadcast %cst_56 : f32 to vector<1x128xf32>
      %c0_57 = arith.constant 0 : index
      %c0_58 = arith.constant 0 : index
      %74 = vector.load %arg12[%c0_57, %c0_58] : memref<1x128xf32, #tpu.memory_space<vmem>>, vector<1x128xf32>
      tpu.vector_store %arg12[%c0_57, %c0_58], %73 {strides = array<i32>} : memref<1x128xf32, #tpu.memory_space<vmem>>, vector<1x128xf32>,
    } else {
    }
    %c0 = arith.constant 0 : index
    %c0_1 = arith.constant 0 : index
    %3 = vector.load %arg4[%c0, %c0_1] : memref<1x128xbf16, #tpu.memory_space<vmem>>, vector<1x128xbf16>
    %c0_2 = arith.constant 0 : index
    %4 = memref.load %arg5[%c0_2] : memref<1xf32, #tpu.memory_space<smem>>
    %c0_3 = arith.constant 0 : index
    %c0_4 = arith.constant 0 : index
    %c0_5 = arith.constant 0 : index
    %5 = vector.load %arg2[%c0_3, %c0_4, %c0_5] : memref<1x16x128xbf16, #tpu.memory_space<vmem>>, vector<1x16x128xbf16>
    %6 = vector.shape_cast %5 : vector<1x16x128xbf16> to vector<16x128xbf16>
    %c0_6 = arith.constant 0 : index
    %c0_7 = arith.constant 0 : index
    %c0_8 = arith.constant 0 : index
    %7 = vector.load %arg3[%c0_6, %c0_7, %c0_8] : memref<1x16x128xbf16, #tpu.memory_space<vmem>>, vector<1x16x128xbf16>
    %8 = vector.shape_cast %7 : vector<1x16x128xbf16> to vector<16x128xbf16>
    %cst = arith.constant dense<0.000000e+00> : vector<1x16xf32>
    %9 = tpu.matmul %3, %6, %cst {dimension_numbers = #tpu.dot_dimension_numbers<[1], [1], [0], [0], [0, 0, 1, 0], [], []>} : vector<1x128xbf16>, vector<16x128xbf16>, vector<1x16xf32> -> vector<1x16xf32>
    %10 = vector.broadcast %4 : f32 to vector<1x16xf32>
    %11 = arith.addf %9, %10 : vector<1x16xf32>
    %c0_9 = arith.constant 0 : index
    %c0_10 = arith.constant 0 : index
    %12 = vector.load %arg7[%c0_9, %c0_10] : memref<1x1xf32, #tpu.memory_space<vmem>>, vector<1x1xf32>
    %cst_11 = arith.constant dense<0xFF800000> : vector<1xf32>
    %13 = vector.multi_reduction <maximumf>, %11, %cst_11 [1] : vector<1x16xf32> to vector<1xf32>
    %14 = vector.shape_cast %13 : vector<1xf32> to vector<1x1xf32>
    %15 = arith.maximumf %12, %14 : vector<1x1xf32>
    %16 = arith.subf %12, %15 : vector<1x1xf32>
    %17 = math.exp %16 : vector<1x1xf32>
    %18 = vector.broadcast %15 : vector<1x1xf32> to vector<1x16xf32>
    %19 = arith.subf %11, %18 : vector<1x16xf32>
    %20 = math.exp %19 : vector<1x16xf32>
    %c0_12 = arith.constant 0 : index
    %c0_13 = arith.constant 0 : index
    %21 = vector.load %arg8[%c0_12, %c0_13] : memref<1x1xf32, #tpu.memory_space<vmem>>, vector<1x1xf32>
    %22 = arith.mulf %17, %21 : vector<1x1xf32>
    %cst_14 = arith.constant dense<0.000000e+00> : vector<1xf32>
    %23 = vector.multi_reduction <add>, %20, %cst_14 [1] : vector<1x16xf32> to vector<1xf32>
    %24 = vector.shape_cast %23 : vector<1xf32> to vector<1x1xf32>
    %25 = arith.addf %22, %24 : vector<1x1xf32>
    %c0_15 = arith.constant 0 : index
    %c0_16 = arith.constant 0 : index
    %26 = vector.load %arg8[%c0_15, %c0_16] : memref<1x1xf32, #tpu.memory_space<vmem>>, vector<1x1xf32>
    tpu.vector_store %arg8[%c0_15, %c0_16], %25 {strides = array<i32>} : memref<1x1xf32, #tpu.memory_space<vmem>>, vector<1x1xf32>,
    %c0_17 = arith.constant 0 : index
    %c0_18 = arith.constant 0 : index
    %27 = vector.load %arg9[%c0_17, %c0_18] : memref<1x128xf32, #tpu.memory_space<vmem>>, vector<1x128xf32>
    %28 = vector.broadcast %17 : vector<1x1xf32> to vector<1x128xf32>
    %29 = arith.mulf %28, %27 : vector<1x128xf32>
    %30 = arith.truncf %20 : vector<1x16xf32> to vector<1x16xbf16>
    %cst_19 = arith.constant dense<0.000000e+00> : vector<1x128xf32>
    %31 = tpu.matmul %30, %6, %cst_19 {dimension_numbers = #tpu.dot_dimension_numbers<[1], [0], [0], [1], [0, 0, 1, 1], [], []>} : vector<1x16xbf16>, vector<16x128xbf16>, vector<1x128xf32> -> vector<1x128xf32>
    %32 = arith.addf %29, %31 : vector<1x128xf32>
    %c0_20 = arith.constant 0 : index
    %c0_21 = arith.constant 0 : index
    %33 = vector.load %arg9[%c0_20, %c0_21] : memref<1x128xf32, #tpu.memory_space<vmem>>, vector<1x128xf32>
    tpu.vector_store %arg9[%c0_20, %c0_21], %32 {strides = array<i32>} : memref<1x128xf32, #tpu.memory_space<vmem>>, vector<1x128xf32>,
    %c0_22 = arith.constant 0 : index
    %c0_23 = arith.constant 0 : index
    %34 = vector.load %arg7[%c0_22, %c0_23] : memref<1x1xf32, #tpu.memory_space<vmem>>, vector<1x1xf32>
    tpu.vector_store %arg7[%c0_22, %c0_23], %15 {strides = array<i32>} : memref<1x1xf32, #tpu.memory_space<vmem>>, vector<1x1xf32>,
    %cst_24 = arith.constant dense<0.000000e+00> : vector<1x16xf32>
    %35 = tpu.matmul %3, %8, %cst_24 {dimension_numbers = #tpu.dot_dimension_numbers<[1], [1], [0], [0], [0, 0, 1, 0], [], []>} : vector<1x128xbf16>, vector<16x128xbf16>, vector<1x16xf32> -> vector<1x16xf32>
    %36 = vector.broadcast %4 : f32 to vector<1x16xf32>
    %37 = arith.addf %35, %36 : vector<1x16xf32>
    %c0_25 = arith.constant 0 : index
    %c0_26 = arith.constant 0 : index
    %38 = vector.load %arg10[%c0_25, %c0_26] : memref<1x1xf32, #tpu.memory_space<vmem>>, vector<1x1xf32>
    %cst_27 = arith.constant dense<0xFF800000> : vector<1xf32>
    %39 = vector.multi_reduction <maximumf>, %37, %cst_27 [1] : vector<1x16xf32> to vector<1xf32>
    %40 = vector.shape_cast %39 : vector<1xf32> to vector<1x1xf32>
    %41 = arith.maximumf %38, %40 : vector<1x1xf32>
    %42 = arith.subf %38, %41 : vector<1x1xf32>
    %43 = math.exp %42 : vector<1x1xf32>
    %44 = vector.broadcast %41 : vector<1x1xf32> to vector<1x16xf32>
    %45 = arith.subf %37, %44 : vector<1x16xf32>
    %46 = math.exp %45 : vector<1x16xf32>
    %c0_28 = arith.constant 0 : index
    %c0_29 = arith.constant 0 : index
    %47 = vector.load %arg11[%c0_28, %c0_29] : memref<1x1xf32, #tpu.memory_space<vmem>>, vector<1x1xf32>
    %48 = arith.mulf %43, %47 : vector<1x1xf32>
    %cst_30 = arith.constant dense<0.000000e+00> : vector<1xf32>
    %49 = vector.multi_reduction <add>, %46, %cst_30 [1] : vector<1x16xf32> to vector<1xf32>
    %50 = vector.shape_cast %49 : vector<1xf32> to vector<1x1xf32>
    %51 = arith.addf %48, %50 : vector<1x1xf32>
    %c0_31 = arith.constant 0 : index
    %c0_32 = arith.constant 0 : index
    %52 = vector.load %arg11[%c0_31, %c0_32] : memref<1x1xf32, #tpu.memory_space<vmem>>, vector<1x1xf32>
    tpu.vector_store %arg11[%c0_31, %c0_32], %51 {strides = array<i32>} : memref<1x1xf32, #tpu.memory_space<vmem>>, vector<1x1xf32>,
    %c0_33 = arith.constant 0 : index
    %c0_34 = arith.constant 0 : index
    %53 = vector.load %arg12[%c0_33, %c0_34] : memref<1x128xf32, #tpu.memory_space<vmem>>, vector<1x128xf32>
    %54 = vector.broadcast %43 : vector<1x1xf32> to vector<1x128xf32>
    %55 = arith.mulf %54, %53 : vector<1x128xf32>
    %56 = arith.truncf %46 : vector<1x16xf32> to vector<1x16xbf16>
    %cst_35 = arith.constant dense<0.000000e+00> : vector<1x128xf32>
    %57 = tpu.matmul %56, %8, %cst_35 {dimension_numbers = #tpu.dot_dimension_numbers<[1], [0], [0], [1], [0, 0, 1, 1], [], []>} : vector<1x16xbf16>, vector<16x128xbf16>, vector<1x128xf32> -> vector<1x128xf32>
    %58 = arith.addf %55, %57 : vector<1x128xf32>
    %c0_36 = arith.constant 0 : index
    %c0_37 = arith.constant 0 : index
    %59 = vector.load %arg12[%c0_36, %c0_37] : memref<1x128xf32, #tpu.memory_space<vmem>>, vector<1x128xf32>
    tpu.vector_store %arg12[%c0_36, %c0_37], %58 {strides = array<i32>} : memref<1x128xf32, #tpu.memory_space<vmem>>, vector<1x128xf32>,
    %c0_38 = arith.constant 0 : index
    %c0_39 = arith.constant 0 : index
    %60 = vector.load %arg10[%c0_38, %c0_39] : memref<1x1xf32, #tpu.memory_space<vmem>>, vector<1x1xf32>
    tpu.vector_store %arg10[%c0_38, %c0_39], %41 {strides = array<i32>} : memref<1x1xf32, #tpu.memory_space<vmem>>, vector<1x1xf32>,
    %c0_i32_40 = arith.constant 0 : i32
    %61 = arith.cmpi eq, %arg1, %c0_i32_40 : i32
    %62 = arith.extui %61 : i1 to i32
    %c0_i32_41 = arith.constant 0 : i32
    %63 = arith.cmpi ne, %62, %c0_i32_41 : i32
    scf.if %63 {
      %c0_42 = arith.constant 0 : index
      %c0_43 = arith.constant 0 : index
      %64 = vector.load %arg9[%c0_42, %c0_43] : memref<1x128xf32, #tpu.memory_space<vmem>>, vector<1x128xf32>
      %c0_44 = arith.constant 0 : index
      %c0_45 = arith.constant 0 : index
      %65 = vector.load %arg8[%c0_44, %c0_45] : memref<1x1xf32, #tpu.memory_space<vmem>>, vector<1x1xf32>
      %66 = vector.broadcast %65 : vector<1x1xf32> to vector<1x128xf32>
      %67 = arith.divf %64, %66 : vector<1x128xf32>
      %c0_46 = arith.constant 0 : index
      %c0_47 = arith.constant 0 : index
      %68 = vector.load %arg12[%c0_46, %c0_47] : memref<1x128xf32, #tpu.memory_space<vmem>>, vector<1x128xf32>
      %c0_48 = arith.constant 0 : index
      %c0_49 = arith.constant 0 : index
      %69 = vector.load %arg11[%c0_48, %c0_49] : memref<1x1xf32, #tpu.memory_space<vmem>>, vector<1x1xf32>
      %70 = vector.broadcast %69 : vector<1x1xf32> to vector<1x128xf32>
      %71 = arith.divf %68, %70 : vector<1x128xf32>
      %72 = arith.mulf %67, %71 : vector<1x128xf32>
      %cst_50 = arith.constant dense<0.000000e+00> : vector<1xf32>
      %73 = vector.multi_reduction <add>, %72, %cst_50 [1] : vector<1x128xf32> to vector<1xf32>
      %74 = vector.shape_cast %73 : vector<1xf32> to vector<1x1xf32>
      %75 = arith.mulf %67, %67 : vector<1x128xf32>
      %cst_51 = arith.constant dense<0.000000e+00> : vector<1xf32>
      %76 = vector.multi_reduction <add>, %75, %cst_51 [1] : vector<1x128xf32> to vector<1xf32>
      %77 = vector.shape_cast %76 : vector<1xf32> to vector<1x1xf32>
      %78 = math.sqrt %77 : vector<1x1xf32>
      %79 = arith.mulf %71, %71 : vector<1x128xf32>
      %cst_52 = arith.constant dense<0.000000e+00> : vector<1xf32>
      %80 = vector.multi_reduction <add>, %79, %cst_52 [1] : vector<1x128xf32> to vector<1xf32>
      %81 = vector.shape_cast %80 : vector<1xf32> to vector<1x1xf32>
      %82 = math.sqrt %81 : vector<1x1xf32>
      %83 = arith.mulf %78, %82 : vector<1x1xf32>
      %cst_53 = arith.constant 9.99999997E-7 : f32
      %84 = vector.broadcast %cst_53 : f32 to vector<1x1xf32>
      %85 = arith.maximumf %83, %84 : vector<1x1xf32>
      %86 = arith.divf %74, %85 : vector<1x1xf32>
      %c0_54 = arith.constant 0 : index
      %c0_55 = arith.constant 0 : index
      %c0_56 = arith.constant 0 : index
      %87 = vector.load %arg6[%c0_54, %c0_55, %c0_56] : memref<1x1x1xf32, #tpu.memory_space<vmem>>, vector<1x1x1xf32>
      %88 = vector.shape_cast %87 : vector<1x1x1xf32> to vector<1x1xf32>
      %89 = vector.shape_cast %86 : vector<1x1xf32> to vector<1x1x1xf32>
      tpu.vector_store %arg6[%c0_54, %c0_55, %c0_56], %89 {strides = array<i32>} : memref<1x1x1xf32, #tpu.memory_space<vmem>>, vector<1x1x1xf32>,
    } else {
    }
    return
  }
  func.func @transform_0(%arg0: i32, %arg1: i32) -> (i32, i32, i32) {
    %c0_i32 = arith.constant 0 : i32
    %c0_i32_0 = arith.constant 0 : i32
    return %arg0, %arg1, %c0_i32 : i32, i32, i32
  }
  func.func @transform_1(%arg0: i32, %arg1: i32) -> (i32, i32, i32) {
    %c0_i32 = arith.constant 0 : i32
    %c0_i32_0 = arith.constant 0 : i32
    return %arg0, %arg1, %c0_i32 : i32, i32, i32
  }
  func.func @transform_2(%arg0: i32, %arg1: i32) -> (i32, i32) {
    %c0_i32 = arith.constant 0 : i32
    %c0_i32_0 = arith.constant 0 : i32
    %c0_i32_1 = arith.constant 0 : i32
    return %c0_i32, %c0_i32_0 : i32, i32
  }
  func.func @transform_3(%arg0: i32, %arg1: i32) -> i32 {
    %c0_i32 = arith.constant 0 : i32
    %c0_i32_0 = arith.constant 0 : i32
    return %c0_i32 : i32
  }
  func.func @transform_4(%arg0: i32, %arg1: i32) -> (i32, i32, i32) {
    %c0_i32 = arith.constant 0 : i32
    %c0_i32_0 = arith.constant 0 : i32
    %c0_i32_1 = arith.constant 0 : i32
    return %arg0, %c0_i32, %c0_i32_0 : i32, i32, i32
  }
}

</mosaic_0001>

<llo_original>
// kernel: tpu_custom_call.1
$region0: #{tpu_custom_call.1}
  #allocation0 [shape = 'u32[]', space=smem, size = 0x4, offset = 0x4, fixed_abs, tag = 'smem constant byte address 0x4 - core index']
  #allocation1 [shape = 'u32[72,128]{1,0:T(1,128)}', space=vmem, size = 0x9000, scoped, tag = 'internal scratch']
  #allocation2 [shape = 'f32[1,1]{1,0:T(1,128)}', space=vmem, size = 0x200, scoped, tag = 'scratch operand']
  #allocation3 [shape = 'f32[1,1]{1,0:T(1,128)}', space=vmem, size = 0x200, scoped, tag = 'scratch operand']
  #allocation4 [shape = 'f32[1,128]{1,0:T(1,128)}', space=vmem, size = 0x200, scoped, tag = 'scratch operand']
  #allocation5 [shape = 'f32[1,1]{1,0:T(1,128)}', space=vmem, size = 0x200, scoped, tag = 'scratch operand']
  #allocation6 [shape = 'f32[1,1]{1,0:T(1,128)}', space=vmem, size = 0x200, scoped, tag = 'scratch operand']
  #allocation7 [shape = 'f32[1,128]{1,0:T(1,128)}', space=vmem, size = 0x200, scoped, tag = 'scratch operand']
  #allocation8 [shape = 'f32[1]{0:T(128)S(6)}', space=smem, size = 0x200, scoped, tag = 'scoped memory for tpu_custom_call.1']
  %s0 = inlined_call_operand.hbm [shape: bf16[2,16,128], index: 0, kind: input, shape index: {}]
  %s1 = inlined_call_operand.hbm [shape: bf16[2,16,128], index: 1, kind: input, shape index: {}]
  %s2 = inlined_call_operand.vmem [shape: bf16[1,128], index: 2, kind: input, shape index: {}]
  %s3 = inlined_call_operand.<no memory space> [shape: f32[1], index: 3, kind: input, shape index: {}]
  %s4 = inlined_call_operand.vmem [shape: f32[2,1,1], index: 4, kind: output, shape index: {}]
  %s5 = sld [smem:[#allocation0]]
  $region65: #{tpu_custom_call.1} parent=0
    _
  %s7 = ssub.s32 1, %s5
  %s8 = scalar_select 0, %s7, %s5
  %9 = sst [smem:[#allocation8]] %s3
  $region1: #{tpu_custom_call.1} parent=0
    #allocation9 [shape = 'u8[8192]{0}', space=vmem, size = 0x2000, scoped, tag = 'input window, operand 0']
    #allocation10 [shape = 's32[2]{0}', space=sflag, size = 0x8, scoped, tag = 'scoped memory for tpu_custom_call.1']
    #allocation11 [shape = 'u8[8192]{0}', space=vmem, size = 0x2000, scoped, tag = 'input window, operand 1']
    #allocation12 [shape = 's32[2]{0}', space=sflag, size = 0x8, scoped, tag = 'scoped memory for tpu_custom_call.1']
    %10 = vsyncpa [#allocation10], 0
    %s11 = scalar_lea.sflag [#allocation10], 1
    %12 = vsyncpa %s11, 0
    %13 = vsyncpa [#allocation12], 0
    %s14 = scalar_lea.sflag [#allocation12], 1
    %15 = vsyncpa %s14, 0
    loop: start=0, step=1, limit=4
    $region2: #{tpu_custom_call.1} parent=1 // loop_pre_header
      _
    $region3: #{tpu_custom_call.1} parent=1 // loop_header
      %s17 = sphi 0, %s21
      %p18 = scmp.ge.s32.totalorder %s17, 4
      %s24 = sphi 0, %s36
      %s25 = sphi 0, %s32
      %s26 = sphi 0, %s24
      %s27 = sphi 0, %s25
      %s28 = sphi 0, %s26
      %s29 = sphi 0, %s27
      %s41 = sphi 0, %s43
      %s44 = sphi 0, %s41
      %s45 = sphi 0, %s44
      %s61 = sphi 0, %s45
      %s69 = sphi 0, %s71
      %s72 = sphi 0, %s69
      %s73 = sphi 0, %s72
      %s89 = sphi 0, %s73
      %s93 = sphi 0, %s93
      %s95 = sphi 0, %s93
      %s96 = sphi 0, %s95
      %s110 = sphi 0, %s96
      %s114 = sphi 0, %s114
      %s116 = sphi 0, %s114
      %s117 = sphi 0, %s116
      %s131 = sphi 0, %s117
      %s137 = sphi 0, %s139
      %s140 = sphi 0, %s137
      %s141 = sphi 0, %s140
      %s157 = sphi 0, %s141
    $region4: #{tpu_custom_call.1} parent=1 // loop_header_branch
      %20 = sbr.rel (%p18) target = $region8
    $region5: #{tpu_custom_call.1} parent=1 // loop_body
      %s22 = ssub.s32 %s17, 1
      %s23 = ssub.s32 %s17, 2
      %s30 = sadd.s32 1, %s25
      %p31 = scmp.ge.s32.totalorder %s30, 1
      %s32 = scalar_select %p31, 0, %s30
      %s33 = sadd.s32 1, %s24
      %s34 = scalar_select %p31, %s33, %s24
      %p35 = scmp.ge.s32.totalorder %s34, 2
      %s36 = scalar_select %p35, 0, %s34
      %s37 = ssub.s32 %s24, %s36
      %s38 = ssub.s32 %s25, %s32
      %s39 = sor.u32 %s37, %s38
      %p40 = scmp.eq.s32.totalorder %s39, 0
      %s42 = sadd.s32 %s41, 1
      %s43 = scalar_select %p40, %s41, %s42
      %p46 = pneg %p40
      %p47 = scmp.eq.s32.totalorder %s17, 1
      %p48 = por %p46, %p47
      %p49 = scmp.ne.s32.totalorder %s41, %s44
      %p50 = scmp.eq.s32.totalorder %s17, 0
      %p51 = por %p49, %p50
      %p52 = scmp.ne.s32.totalorder %s41, %s44
      %p53 = scmp.eq.s32.totalorder %s22, 1
      %p54 = por %p52, %p53
      %p55 = scmp.ne.s32.totalorder %s44, %s45
      %p56 = scmp.eq.s32.totalorder %s22, 0
      %p57 = por %p55, %p56
      %p58 = scmp.ne.s32.totalorder %s44, %s45
      %p59 = scmp.eq.s32.totalorder %s23, 1
      %p60 = por %p58, %p59
      %p62 = scmp.ne.s32.totalorder %s45, %s61
      %p63 = scmp.eq.s32.totalorder %s23, 0
      %p64 = por %p62, %p63
      %s65 = ssub.s32 %s24, %s36
      %s66 = ssub.s32 %s25, %s32
      %s67 = sor.u32 %s65, %s66
      %p68 = scmp.eq.s32.totalorder %s67, 0
      %s70 = sadd.s32 %s69, 1
      %s71 = scalar_select %p68, %s69, %s70
      %p74 = pneg %p68
      %p75 = scmp.eq.s32.totalorder %s17, 1
      %p76 = por %p74, %p75
      %p77 = scmp.ne.s32.totalorder %s69, %s72
      %p78 = scmp.eq.s32.totalorder %s17, 0
      %p79 = por %p77, %p78
      %p80 = scmp.ne.s32.totalorder %s69, %s72
      %p81 = scmp.eq.s32.totalorder %s22, 1
      %p82 = por %p80, %p81
      %p83 = scmp.ne.s32.totalorder %s72, %s73
      %p84 = scmp.eq.s32.totalorder %s22, 0
      %p85 = por %p83, %p84
      %p86 = scmp.ne.s32.totalorder %s72, %s73
      %p87 = scmp.eq.s32.totalorder %s23, 1
      %p88 = por %p86, %p87
      %p90 = scmp.ne.s32.totalorder %s73, %s89
      %p91 = scmp.eq.s32.totalorder %s23, 0
      %p92 = por %p90, %p91
      %s94 = sadd.s32 %s93, 1
      %p97 = scmp.eq.s32.totalorder %s17, 1
      %p98 = scmp.ne.s32.totalorder %s93, %s95
      %p99 = scmp.eq.s32.totalorder %s17, 0
      %p100 = por %p98, %p99
      %p101 = scmp.ne.s32.totalorder %s93, %s95
      %p102 = scmp.eq.s32.totalorder %s22, 1
      %p103 = por %p101, %p102
      %p104 = scmp.ne.s32.totalorder %s95, %s96
      %p105 = scmp.eq.s32.totalorder %s22, 0
      %p106 = por %p104, %p105
      %p107 = scmp.ne.s32.totalorder %s95, %s96
      %p108 = scmp.eq.s32.totalorder %s23, 1
      %p109 = por %p107, %p108
      %p111 = scmp.ne.s32.totalorder %s96, %s110
      %p112 = scmp.eq.s32.totalorder %s23, 0
      %p113 = por %p111, %p112
      %s115 = sadd.s32 %s114, 1
      %p118 = scmp.eq.s32.totalorder %s17, 1
      %p119 = scmp.ne.s32.totalorder %s114, %s116
      %p120 = scmp.eq.s32.totalorder %s17, 0
      %p121 = por %p119, %p120
      %p122 = scmp.ne.s32.totalorder %s114, %s116
      %p123 = scmp.eq.s32.totalorder %s22, 1
      %p124 = por %p122, %p123
      %p125 = scmp.ne.s32.totalorder %s116, %s117
      %p126 = scmp.eq.s32.totalorder %s22, 0
      %p127 = por %p125, %p126
      %p128 = scmp.ne.s32.totalorder %s116, %s117
      %p129 = scmp.eq.s32.totalorder %s23, 1
      %p130 = por %p128, %p129
      %p132 = scmp.ne.s32.totalorder %s117, %s131
      %p133 = scmp.eq.s32.totalorder %s23, 0
      %p134 = por %p132, %p133
      %s135 = ssub.s32 %s24, %s36
      %p136 = scmp.eq.s32.totalorder %s135, 0
      %s138 = sadd.s32 %s137, 1
      %s139 = scalar_select %p136, %s137, %s138
      %p142 = pneg %p136
      %p143 = scmp.eq.s32.totalorder %s17, 1
      %p144 = por %p142, %p143
      %p145 = scmp.ne.s32.totalorder %s137, %s140
      %p146 = scmp.eq.s32.totalorder %s17, 0
      %p147 = por %p145, %p146
      %p148 = scmp.ne.s32.totalorder %s137, %s140
      %p149 = scmp.eq.s32.totalorder %s22, 1
      %p150 = por %p148, %p149
      %p151 = scmp.ne.s32.totalorder %s140, %s141
      %p152 = scmp.eq.s32.totalorder %s22, 0
      %p153 = por %p151, %p152
      %p154 = scmp.ne.s32.totalorder %s140, %s141
      %p155 = scmp.eq.s32.totalorder %s23, 1
      %p156 = por %p154, %p155
      %p158 = scmp.ne.s32.totalorder %s141, %s157
      %p159 = scmp.eq.s32.totalorder %s23, 0
      %p160 = por %p158, %p159
      %p161 = scmp.le.s32.totalorder 1, %s17
      %p162 = scmp.lt.s32.totalorder %s17, 3
      %p163 = pnand %p161, %p162
      %p164 = pneg %p163
      // Predicated region
      $region9: #{tpu_custom_call.1} parent=5 // pred_check
        _
      $region10: #{tpu_custom_call.1} parent=5 // pred_check_branch
        %166 = sbr.rel (%p163) target = $region12
      $region11: #{tpu_custom_call.1} parent=5 // pred_region
        %s167 = ssub.s32 %s17, 1
        // Predicated region
        $region13: #{tpu_custom_call.1} parent=11 // pred_check
          %p168 = pneg %p106
        $region14: #{tpu_custom_call.1} parent=11 // pred_check_branch
          %170 = sbr.rel (%p168) target = $region16
        $region15: #{tpu_custom_call.1} parent=11 // pred_region
          _
        $region16: #{tpu_custom_call.1} parent=11 // pred_fallthru
          _
        // Predicated region
        $region17: #{tpu_custom_call.1} parent=11 // pred_check
          %p171 = pneg %p127
        $region18: #{tpu_custom_call.1} parent=11 // pred_check_branch
          %173 = sbr.rel (%p171) target = $region20
        $region19: #{tpu_custom_call.1} parent=11 // pred_region
          _
        $region20: #{tpu_custom_call.1} parent=11 // pred_fallthru
          _
      $region12: #{tpu_custom_call.1} parent=5 // pred_fallthru
        _
      %p174 = scmp.lt.s32.totalorder %s17, 2
      // Predicated region
      $region21: #{tpu_custom_call.1} parent=5 // pred_check
        %p175 = pneg %p174
      $region22: #{tpu_custom_call.1} parent=5 // pred_check_branch
        %177 = sbr.rel (%p175) target = $region24
      $region23: #{tpu_custom_call.1} parent=5 // pred_region
        // Predicated region
        $region25: #{tpu_custom_call.1} parent=23 // pred_check
          %p178 = pneg %p51
        $region26: #{tpu_custom_call.1} parent=23 // pred_check_branch
          %180 = sbr.rel (%p178) target = $region28
        $region27: #{tpu_custom_call.1} parent=23 // pred_region
          %s181 = sand.u32 %s41, 1
          %s182 = scalar_lea.sflag [#allocation10], %s181
          %s183 = sand.u32 %s41, 1
          %s184 = smul.addr %s183, 8
          %s185 = scalar_lea.vmem [#allocation9], %s184
          %s186 = smul.u32 2, %s25
          %188 = vsyncadd %s182, 0
          %s189 = smul.addr %s24, 2
          %s190 = sadd.s32 %s186, %s189
          %s191 = smul.addr %s190, 4
          %s192 = scalar_lea.hbm %s0, %s191
          %s193 = sshll.u32 %s192, 4
          %s194 = int_to_ptr.hbm [resolvable:$true] %s193
          %s195 = sshll.u32 %s185, 4
          %s196 = int_to_ptr.vmem [resolvable:$true] %s195
          %201 = dma.hbm_to_vmem [thread:$0]  %s194, 128, %s196, %s182, 64, 64, 4
        $region28: #{tpu_custom_call.1} parent=23 // pred_fallthru
          _
        // Predicated region
        $region29: #{tpu_custom_call.1} parent=23 // pred_check
          %p202 = pneg %p79
        $region30: #{tpu_custom_call.1} parent=23 // pred_check_branch
          %204 = sbr.rel (%p202) target = $region32
        $region31: #{tpu_custom_call.1} parent=23 // pred_region
          %s205 = sand.u32 %s69, 1
          %s206 = scalar_lea.sflag [#allocation12], %s205
          %s207 = sand.u32 %s69, 1
          %s208 = smul.addr %s207, 8
          %s209 = scalar_lea.vmem [#allocation11], %s208
          %s210 = smul.u32 2, %s25
          %212 = vsyncadd %s206, 0
          %s213 = smul.addr %s24, 2
          %s214 = sadd.s32 %s210, %s213
          %s215 = smul.addr %s214, 4
          %s216 = scalar_lea.hbm %s1, %s215
          %s217 = sshll.u32 %s216, 4
          %s218 = int_to_ptr.hbm [resolvable:$true] %s217
          %s219 = sshll.u32 %s209, 4
          %s220 = int_to_ptr.vmem [resolvable:$true] %s219
          %225 = dma.hbm_to_vmem [thread:$0]  %s218, 128, %s220, %s206, 64, 64, 4
        $region32: #{tpu_custom_call.1} parent=23 // pred_fallthru
          _
      $region24: #{tpu_custom_call.1} parent=5 // pred_fallthru
        _
      %p226 = scmp.le.s32.totalorder 1, %s17
      %p227 = scmp.lt.s32.totalorder %s17, 3
      %p228 = pnand %p226, %p227
      %p229 = pneg %p228
      // Predicated region
      $region33: #{tpu_custom_call.1} parent=5 // pred_check
        _
      $region34: #{tpu_custom_call.1} parent=5 // pred_check_branch
        %231 = sbr.rel (%p228) target = $region36
      $region35: #{tpu_custom_call.1} parent=5 // pred_region
        %s232 = ssub.s32 %s17, 1
        %s233 = sand.u32 %s44, 1
        %s234 = scalar_lea.sflag [#allocation10], %s233
        %s235 = sand.u32 %s44, 1
        %s236 = smul.addr %s235, 8
        %s237 = scalar_lea.vmem [#allocation9], %s236
        // Predicated region
        $region37: #{tpu_custom_call.1} parent=35 // pred_check
          %p238 = pneg %p57
        $region38: #{tpu_custom_call.1} parent=35 // pred_check_branch
          %240 = sbr.rel (%p238) target = $region40
        $region39: #{tpu_custom_call.1} parent=35 // pred_region
          %242 = dma.done %s234, 128
        $region40: #{tpu_custom_call.1} parent=35 // pred_fallthru
          _
        %s243 = sand.u32 %s72, 1
        %s244 = scalar_lea.sflag [#allocation12], %s243
        %s245 = sand.u32 %s72, 1
        %s246 = smul.addr %s245, 8
        %s247 = scalar_lea.vmem [#allocation11], %s246
        // Predicated region
        $region41: #{tpu_custom_call.1} parent=35 // pred_check
          %p248 = pneg %p85
        $region42: #{tpu_custom_call.1} parent=35 // pred_check_branch
          %250 = sbr.rel (%p248) target = $region44
        $region43: #{tpu_custom_call.1} parent=35 // pred_region
          %252 = dma.done %s244, 128
        $region44: #{tpu_custom_call.1} parent=35 // pred_fallthru
          _
        %s253 = sand.u32 %s44, 1
        %s254 = scalar_lea.sflag [#allocation10], %s253
        %s255 = sand.u32 %s44, 1
        %s256 = smul.addr %s255, 8
        %s257 = scalar_lea.vmem [#allocation9], %s256
        %p258 = pneg %p57
        %p259 = pneg %p54
        %s260 = sand.u32 %s72, 1
        %s261 = scalar_lea.sflag [#allocation12], %s260
        %s262 = sand.u32 %s72, 1
        %s263 = smul.addr %s262, 8
        %s264 = scalar_lea.vmem [#allocation11], %s263
        %p265 = pneg %p85
        %p266 = pneg %p82
        %p267 = pneg %p106
        %p268 = pneg %p103
        %p269 = pneg %p127
        %p270 = pneg %p124
        %p271 = pneg %p153
        %p272 = pneg %p150
        %p273 = scmp.lt.s32.totalorder %s26, 1
        %s274 = scalar_select %p273, %s26, 1
        %s275 = scalar_lea.vmem %s4, %s274
        %s276 = smul.u32 2, %s27
        %s277 = smul.u32 2, %s27
        %p278 = scmp.lt.s32.totalorder %s26, 1
        %s279 = scalar_select %p278, %s26, 1
        %s280 = scalar_lea.vmem %s4, %s279
        %p282 = scmp.eq.s32.totalorder %s27, 0
        // Predicated region
        $region45: #{tpu_custom_call.1} parent=35 // pred_check
          %p283 = pneg %p282
        $region46: #{tpu_custom_call.1} parent=35 // pred_check_branch
          %285 = sbr.rel (%p283) target = $region48
        $region47: #{tpu_custom_call.1} parent=35 // pred_region
          %vm286 = vcmask 0
          %287 = vst.msk [vmem:[#allocation2] sm:$0x1] %vm286, -1e+30
          %288 = vst.msk [vmem:[#allocation5] sm:$0x1] %vm286, -1e+30
          %289 = vst.msk [vmem:[#allocation3] sm:$0x1] %vm286, 0.0
          %290 = vst.msk [vmem:[#allocation6] sm:$0x1] %vm286, 0.0
          %291 = vst [vmem:[#allocation4] sm:$0x1] 0.0
          %292 = vst [vmem:[#allocation7] sm:$0x1] 0.0
        $region48: #{tpu_custom_call.1} parent=35 // pred_fallthru
          _
        %v293 = vld [vmem:[%s2] sm:$0x1]
        %s294 = sld [smem:[#allocation8]]
        %v295 = vld [vmem:[%s237] sm:$0xf]
        %v296 = vld [vmem:[%s237 + $0x4] sm:$0xf]
        %v297 = vld [vmem:[%s247] sm:$0xf]
        %v298 = vld [vmem:[%s247 + $0x4] sm:$0xf]
        %v299 = vstv %s294
        %v302 = vunpack.c.l.b16 %v295
        %v303 = vunpack.c.l.b16 %v296
        %v304 = vpack.c.b16 %v303, %v302
        %306 = vmatpush.bf16.xpose.msra.mxu0 0
        %307 = vmatpush.bf16.xpose.msra.mxu0 0
        %308 = vmatpush.bf16.xpose.msra.mxu0 0
        %309 = vmatpush.bf16.xpose.msra.mxu0 0
        %310 = vmatpush.bf16.xpose.msra.mxu0 0
        %311 = vmatpush.bf16.xpose.msra.mxu0 0
        %312 = vmatpush.bf16.xpose.msra.mxu0 0
        %313 = vmatpush.bf16.xpose.msra.mxu0 %v304
        %314 = vmatmul.bf16.gmra.mxu0 %v293
        %v315 = vpop.f32.mrf.mxu0
        %v316 = vadd.f32 %v299, %v315
        %v317 = vpop.f32.mrf.mxu0
        %318 = vdwg.mxu0
        %v319 = vld [vmem:[#allocation2] sm:$0x1]
        %vm320 = vcmask 122880
        %v321 = vsel %vm320, %v316, -inf
        %322 = vmax.xlane.f32.xlu0 %v321
        %v323 = vpop.xlane.xlu0 %322
        %v324 = vmax.f32 %v319, %v323
        %v325 = vsub.f32 %v319, %v324
        %v326 = vmul.f32 %v325, 1.442695
        %v327 = vpow.pop %v326
        %329 = vset.pattern.permute.xlu0 0
        %330 = vperm.xlu0 %329, %v324
        %v331 = vpop.permute.xlu0 %330
        %v333 = vperm.slane %v331, 0
        %v334 = vsub.f32 %v316, %v333
        %v335 = vmul.f32 %v334, 1.442695
        %v336 = vpow.pop %v335
        %v337 = vld [vmem:[#allocation3] sm:$0x1]
        %v338 = vmul.f32 %v327, %v337
        %v339 = vsel %vm320, %v336, 0.0
        %340 = vadd.xlane.f32.xlu0 %v339
        %v341 = vpop.xlane.xlu0 %340
        %v342 = vadd.f32 %v338, %v341
        %vm343 = vcmask 0
        %344 = vst.msk [vmem:[#allocation3] sm:$0x1] %vm343, %v342
        %v345 = vld [vmem:[#allocation4] sm:$0x1]
        %347 = vset.pattern.permute.xlu0 0
        %348 = vperm.xlu0 %347, %v327
        %v349 = vpop.permute.xlu0 %348
        %v351 = vperm.slane %v349, 0
        %v352 = vmul.f32 %v351, %v345
        %v353 = vpack.c.bf16 %v336, %v336
        %vm354 = vcmask 130048
        %v356 = vsel %vm354, %v353, 0
        %358 = vmatpush.bf16.msra.mxu0 0
        %359 = vmatpush.bf16.msra.mxu0 0
        %360 = vmatpush.bf16.msra.mxu0 0
        %361 = vmatpush.bf16.msra.mxu0 0
        %362 = vmatpush.bf16.msra.mxu0 0
        %363 = vmatpush.bf16.msra.mxu0 0
        %364 = vmatpush.bf16.msra.mxu0 0
        %365 = vmatpush.bf16.msra.mxu0 %v304
        %366 = vmatmul.bf16.gmra.mxu0 %v356
        %v367 = vpop.f32.mrf.mxu0
        %v368 = vadd.f32 0.0, %v367
        %v369 = vpop.f32.mrf.mxu0
        %370 = vdwg.mxu0
        %v371 = vadd.f32 %v352, %v368
        %372 = vst [vmem:[#allocation4] sm:$0x1] %v371
        %373 = vst.msk [vmem:[#allocation2] sm:$0x1] %vm343, %v324
        %v376 = vunpack.c.l.b16 %v297
        %v377 = vunpack.c.l.b16 %v298
        %v378 = vpack.c.b16 %v377, %v376
        %380 = vmatpush.bf16.xpose.msra.mxu0 0
        %381 = vmatpush.bf16.xpose.msra.mxu0 0
        %382 = vmatpush.bf16.xpose.msra.mxu0 0
        %383 = vmatpush.bf16.xpose.msra.mxu0 0
        %384 = vmatpush.bf16.xpose.msra.mxu0 0
        %385 = vmatpush.bf16.xpose.msra.mxu0 0
        %386 = vmatpush.bf16.xpose.msra.mxu0 0
        %387 = vmatpush.bf16.xpose.msra.mxu0 %v378
        %388 = vmatmul.bf16.gmra.mxu0 %v293
        %v389 = vpop.f32.mrf.mxu0
        %v390 = vadd.f32 %v299, %v389
        %v391 = vpop.f32.mrf.mxu0
        %392 = vdwg.mxu0
        %v393 = vld [vmem:[#allocation5] sm:$0x1]
        %v394 = vsel %vm320, %v390, -inf
        %395 = vmax.xlane.f32.xlu0 %v394
        %v396 = vpop.xlane.xlu0 %395
        %v397 = vmax.f32 %v393, %v396
        %v398 = vsub.f32 %v393, %v397
        %v399 = vmul.f32 %v398, 1.442695
        %v400 = vpow.pop %v399
        %402 = vset.pattern.permute.xlu0 0
        %403 = vperm.xlu0 %402, %v397
        %v404 = vpop.permute.xlu0 %403
        %v406 = vperm.slane %v404, 0
        %v407 = vsub.f32 %v390, %v406
        %v408 = vmul.f32 %v407, 1.442695
        %v409 = vpow.pop %v408
        %v410 = vld [vmem:[#allocation6] sm:$0x1]
        %v411 = vmul.f32 %v400, %v410
        %v412 = vsel %vm320, %v409, 0.0
        %413 = vadd.xlane.f32.xlu0 %v412
        %v414 = vpop.xlane.xlu0 %413
        %v415 = vadd.f32 %v411, %v414
        %416 = vst.msk [vmem:[#allocation6] sm:$0x1] %vm343, %v415
        %v417 = vld [vmem:[#allocation7] sm:$0x1]
        %419 = vset.pattern.permute.xlu0 0
        %420 = vperm.xlu0 %419, %v400
        %v421 = vpop.permute.xlu0 %420
        %v423 = vperm.slane %v421, 0
        %v424 = vmul.f32 %v423, %v417
        %v425 = vpack.c.bf16 %v409, %v409
        %v427 = vsel %vm354, %v425, 0
        %429 = vmatpush.bf16.msra.mxu0 0
        %430 = vmatpush.bf16.msra.mxu0 0
        %431 = vmatpush.bf16.msra.mxu0 0
        %432 = vmatpush.bf16.msra.mxu0 0
        %433 = vmatpush.bf16.msra.mxu0 0
        %434 = vmatpush.bf16.msra.mxu0 0
        %435 = vmatpush.bf16.msra.mxu0 0
        %436 = vmatpush.bf16.msra.mxu0 %v378
        %437 = vmatmul.bf16.gmra.mxu0 %v427
        %v438 = vpop.f32.mrf.mxu0
        %v439 = vadd.f32 0.0, %v438
        %v440 = vpop.f32.mrf.mxu0
        %441 = vdwg.mxu0
        %v442 = vadd.f32 %v424, %v439
        %443 = vst [vmem:[#allocation7] sm:$0x1] %v442
        %444 = vst.msk [vmem:[#allocation5] sm:$0x1] %vm343, %v397
        // Predicated region
        $region49: #{tpu_custom_call.1} parent=35 // pred_check
          %p445 = pneg %p282
        $region50: #{tpu_custom_call.1} parent=35 // pred_check_branch
          %447 = sbr.rel (%p445) target = $region52
        $region51: #{tpu_custom_call.1} parent=35 // pred_region
          %v448 = vld [vmem:[#allocation4] sm:$0x1]
          %v449 = vld [vmem:[#allocation3] sm:$0x1]
          %451 = vset.pattern.permute.xlu0 0
          %452 = vperm.xlu0 %451, %v449
          %v453 = vpop.permute.xlu0 %452
          %v455 = vperm.slane %v453, 0
          %v456 = vrcp.pop %v455
          %v457 = vmul.f32 %v455, %v456
          %v458 = vsub.f32 1.0, %v457
          %v459 = vmul.f32 %v456, %v458
          %v460 = vadd.f32 %v456, %v459
          %vm461 = vweird.f32 %v455
          %vm462 = vweird.f32 %v456
          %vm463 = vmor %vm461, %vm462
          %v464 = vsel %vm463, %v456, %v460
          %v465 = vand.u32 2147483647, %v455
          %vm466 = vcmp.eq.f32.partialorder %v465, 8.507059e+37
          %v467 = vand.u32 %v455, 2147483648
          %v468 = vor.u32 1.1754944e-38, %v467
          %v469 = vsel %vm466, %v468, %v464
          %v470 = vmul.f32 %v448, %v469
          %v471 = vld [vmem:[#allocation7] sm:$0x1]
          %v472 = vld [vmem:[#allocation6] sm:$0x1]
          %474 = vset.pattern.permute.xlu0 0
          %475 = vperm.xlu0 %474, %v472
          %v476 = vpop.permute.xlu0 %475
          %v478 = vperm.slane %v476, 0
          %v479 = vrcp.pop %v478
          %v480 = vmul.f32 %v478, %v479
          %v481 = vsub.f32 1.0, %v480
          %v482 = vmul.f32 %v479, %v481
          %v483 = vadd.f32 %v479, %v482
          %vm484 = vweird.f32 %v478
          %vm485 = vweird.f32 %v479
          %vm486 = vmor %vm484, %vm485
          %v487 = vsel %vm486, %v479, %v483
          %v488 = vand.u32 2147483647, %v478
          %vm489 = vcmp.eq.f32.partialorder %v488, 8.507059e+37
          %v490 = vand.u32 %v478, 2147483648
          %v491 = vor.u32 1.1754944e-38, %v490
          %v492 = vsel %vm489, %v491, %v487
          %v493 = vmul.f32 %v471, %v492
          %v494 = vmul.f32 %v470, %v493
          %vm495 = vcmask 1040384
          %v496 = vsel %vm495, %v494, 0.0
          %497 = vadd.xlane.f32.xlu0 %v496
          %v498 = vpop.xlane.xlu0 %497
          %v499 = vmul.f32 %v470, %v470
          %v500 = vsel %vm495, %v499, 0.0
          %501 = vadd.xlane.f32.xlu0 %v500
          %v502 = vpop.xlane.xlu0 %501
          %v503 = vrsqrt.pop %v502
          %v504 = vmul.f32 %v503, %v502
          %v505 = vmul.f32 %v504, %v503
          %v506 = vmul.f32 0.5, %v505
          %v507 = vsub.f32 1.5, %v506
          %v508 = vmul.f32 %v503, %v507
          %v509 = vmul.f32 %v502, %v508
          %vm510 = vcmp.eq.f32.partialorder %v502, inf
          %v511 = vsel %vm510, %v502, %v509
          %vm512 = vcmp.eq.f32.partialorder %v502, 0.0
          %v513 = vand.u32 %v502, 2147483648
          %v514 = vsel %vm512, %v513, %v511
          %v515 = vmul.f32 %v493, %v493
          %v516 = vsel %vm495, %v515, 0.0
          %517 = vadd.xlane.f32.xlu0 %v516
          %v518 = vpop.xlane.xlu0 %517
          %v519 = vrsqrt.pop %v518
          %v520 = vmul.f32 %v519, %v518
          %v521 = vmul.f32 %v520, %v519
          %v522 = vmul.f32 0.5, %v521
          %v523 = vsub.f32 1.5, %v522
          %v524 = vmul.f32 %v519, %v523
          %v525 = vmul.f32 %v518, %v524
          %vm526 = vcmp.eq.f32.partialorder %v518, inf
          %v527 = vsel %vm526, %v518, %v525
          %vm528 = vcmp.eq.f32.partialorder %v518, 0.0
          %v529 = vand.u32 %v518, 2147483648
          %v530 = vsel %vm528, %v529, %v527
          %v531 = vmul.f32 %v514, %v530
          %v532 = vmax.f32 %v531, 1e-06
          %v533 = vrcp.pop %v532
          %v534 = vmul.f32 %v532, %v533
          %v535 = vsub.f32 1.0, %v534
          %v536 = vmul.f32 %v533, %v535
          %v537 = vadd.f32 %v533, %v536
          %vm538 = vweird.f32 %v532
          %vm539 = vweird.f32 %v533
          %vm540 = vmor %vm538, %vm539
          %v541 = vsel %vm540, %v533, %v537
          %v542 = vand.u32 2147483647, %v532
          %vm543 = vcmp.eq.f32.partialorder %v542, 8.507059e+37
          %v544 = vand.u32 %v532, 2147483648
          %v545 = vor.u32 1.1754944e-38, %v544
          %v546 = vsel %vm543, %v545, %v541
          %v547 = vmul.f32 %v498, %v546
          %548 = vst.msk [vmem:[%s280] sm:$0x1] %vm343, %v547
        $region52: #{tpu_custom_call.1} parent=35 // pred_fallthru
          _
        %p549 = scmp.lt.s32.totalorder %s26, 1
        %s550 = scalar_select %p549, %s26, 1
        %s551 = scalar_lea.vmem %s4, %s550
        // Predicated region
        $region53: #{tpu_custom_call.1} parent=35 // pred_check
          %p552 = pneg %p150
        $region54: #{tpu_custom_call.1} parent=35 // pred_check_branch
          %554 = sbr.rel (%p552) target = $region56
        $region55: #{tpu_custom_call.1} parent=35 // pred_region
          _
        $region56: #{tpu_custom_call.1} parent=35 // pred_fallthru
          _
      $region36: #{tpu_custom_call.1} parent=5 // pred_fallthru
        _
      %p555 = scmp.le.s32.totalorder 2, %s17
      // Predicated region
      $region57: #{tpu_custom_call.1} parent=5 // pred_check
        %p556 = pneg %p555
      $region58: #{tpu_custom_call.1} parent=5 // pred_check_branch
        %558 = sbr.rel (%p556) target = $region60
      $region59: #{tpu_custom_call.1} parent=5 // pred_region
        %s559 = ssub.s32 %s17, 2
        // Predicated region
        $region61: #{tpu_custom_call.1} parent=59 // pred_check
          %p560 = pneg %p156
        $region62: #{tpu_custom_call.1} parent=59 // pred_check_branch
          %562 = sbr.rel (%p560) target = $region64
        $region63: #{tpu_custom_call.1} parent=59 // pred_region
          %p563 = scmp.lt.s32.totalorder %s28, 1
          %s564 = scalar_select %p563, %s28, 1
          %s565 = scalar_lea.vmem %s4, %s564
        $region64: #{tpu_custom_call.1} parent=59 // pred_fallthru
          _
      $region60: #{tpu_custom_call.1} parent=5 // pred_fallthru
        _
    $region6: #{tpu_custom_call.1} parent=1 // loop_footer
      %s21 = sadd.s32 1, %s17
    $region7: #{tpu_custom_call.1} parent=1 // loop_footer_branch
      %16 = sbr.rel target = $region3
    $region8: #{tpu_custom_call.1} parent=1 // loop_exit
      _
    %566 = vsyncpa [#allocation10], 1
    %s567 = scalar_lea.sflag [#allocation10], 1
    %568 = vsyncpa %s567, 1
    %569 = vsyncpa [#allocation12], 1
    %s570 = scalar_lea.sflag [#allocation12], 1
    %571 = vsyncpa %s570, 1

</llo_original>
